<compile_context>
chip_gen: v5e
topology: v5e:2x2
jax: 0.10.0
libtpu: 0.0.40
codegen_flags: <defaults>
</compile_context>

<pallas_src>
import functools

import jax
import jax.numpy as jnp
from jax.experimental import pallas as pl
from jax.experimental.pallas import tpu as pltpu

_MIB = 1024 * 1024


def _round_up(x: int, m: int) -> int:
    return ((x + m - 1) // m) * m


def _sublane_pack(dtype) -> int:
    # Minimum second-minor tile per dtype: f32 -> 8, bf16/f16 -> 16, int8/fp8 -> 32.
    return {4: 8, 2: 16, 1: 32}.get(jnp.dtype(dtype).itemsize, 8)


def _chip_config():
    """Per-generation tile defaults and VMEM budgets (host-side, static)."""
    kind = ""
    try:
        kind = jax.devices()[0].device_kind.lower()
    except Exception:
        pass
    vmem_cap = None
    try:
        vmem_cap = int(pltpu.get_tpu_info().vmem_capacity_bytes)
    except Exception:
        pass
    if "v7" in kind:
        # 64 MiB/TC; ~310 flop/B needed -> tm~512 stays MXU-bound within VMEM.
        return dict(tm=512, tn_ff=512, vmem_limit_cap=56 * _MIB,
                    resident_budget=40 * _MIB, two_m_tiles=True)
    if "v6" in kind:
        # 128 MiB; ~650 flop/B needed -> tm~1024; allow >64 MiB scoped VMEM.
        return dict(tm=1024, tn_ff=512, vmem_limit_cap=104 * _MIB,
                    resident_budget=88 * _MIB, two_m_tiles=False)
    if "v5 lite" in kind or "v5e" in kind or "v5lite" in kind:
        # 128 MiB; ~240 flop/B -> tm 256-384 suffices; bigger tn_ff cuts grid steps.
        return dict(tm=384, tn_ff=1024, vmem_limit_cap=104 * _MIB,
                    resident_budget=88 * _MIB, two_m_tiles=False)
    # Unknown chip (v4/v5p/interpret/...): conservative middle ground.
    del vmem_cap  # only used implicitly via the caps above
    return dict(tm=512, tn_ff=512, vmem_limit_cap=56 * _MIB,
                resident_budget=40 * _MIB, two_m_tiles=False)


_INV_SQRT2 = 0.7071067811865476


def _gelu_exact_f32(h):
    # Exact (erf-based) GELU, matching torch.nn.functional.gelu default.
    return 0.5 * h * (1.0 + jax.lax.erf(h * _INV_SQRT2))


def _ffn_resident_kernel(x_ref, w1_ref, w2_ref, o_ref):
    # Weights are fully VMEM-resident (constant index_map -> DMA'd once total).
    h = jnp.dot(x_ref[...], w1_ref[...], preferred_element_type=jnp.float32)
    h = _gelu_exact_f32(h)
    o_ref[...] = jnp.dot(h.astype(w2_ref.dtype), w2_ref[...],
                         preferred_element_type=jnp.float32).astype(o_ref.dtype)


def _ffn_streamed_kernel(x_ref, w1_ref, w2_ref, o_ref, acc_ref):
    # x_ref:   (tm, d_model)      activation tile
    # w1_ref:  (d_model, tn_ff)   w1 column tile
    # w2_ref:  (tn_ff, d_model)   w2 row tile
    # o_ref:   (tm, d_model)      output tile
    # acc_ref: (tm, d_model) f32  accumulator scratch
    k = pl.program_id(1)
    last = pl.num_programs(1) - 1

    @pl.when(k == 0)
    def _():
        acc_ref[...] = jnp.zeros_like(acc_ref)

    h = jnp.dot(x_ref[...], w1_ref[...], preferred_element_type=jnp.float32)
    h = _gelu_exact_f32(h)
    part = jnp.dot(h.astype(w2_ref.dtype), w2_ref[...],
                   preferred_element_type=jnp.float32)

    @pl.when(k < last)
    def _():
        acc_ref[...] += part

    @pl.when(k == last)
    def _():
        # Fused final accumulate + cast + store (no extra f32 store/reload).
        o_ref[...] = (acc_ref[...] + part).astype(o_ref.dtype)


def ffn_pallas(x, w1_t, w2_t, *, tm=None, tn_ff=None, mode="auto"):
    """Fused FFN: gelu(x @ w1_t) @ w2_t.

    x:    (..., d_model)
    w1_t: (d_model, d_ff)  -- nn.Linear w1.weight pre-transposed to (in, out)
    w2_t: (d_ff, d_model)  -- nn.Linear w2.weight pre-transposed to (in, out)
    mode: "auto" | "resident" | "streamed"
    """
    cfg = _chip_config()
    orig_shape = x.shape
    d_model = orig_shape[-1]
    d_ff = w1_t.shape[1]
    assert w1_t.shape == (d_model, d_ff) and w2_t.shape == (d_ff, d_model)

    x2d = x.reshape(-1, d_model)
    m = x2d.shape[0]

    xb = jnp.dtype(x.dtype).itemsize
    wb = jnp.dtype(w1_t.dtype).itemsize
    ob = xb
    sub = _sublane_pack(x.dtype)

    # ---------------- tile selection (static, host-side) -------------------
    tm_target = tm if tm is not None else cfg["tm"]
    tn_target = tn_ff if tn_ff is not None else cfg["tn_ff"]

    ff_align = _round_up(d_ff, 128)
    tn_ = min(_round_up(tn_target, 128), ff_align)
    ff_pad = _round_up(ff_align, tn_)

    tm_ = min(_round_up(tm_target, sub), _round_up(m, sub))
    # v7x: keep >= 2 M tiles so ("parallel", ...) shards across both TensorCores.
    if cfg["two_m_tiles"] and m > sub and _round_up(m, tm_) // tm_ < 2:
        tm_ = _round_up(pl.cdiv(_round_up(m, sub), 2), sub)
    m_pad = _round_up(m, tm_)
    n_m_tiles = m_pad // tm_
    n_k = ff_pad // tn_

    # ------------- resident-weights vs streamed-weights decision -----------
    def resident_vmem(tm_r):
        return (2 * tm_r * d_model * xb                               # x tiles
                + 2 * (d_model * ff_pad + ff_pad * d_model) * wb      # weights (+buffering)
                + 2 * tm_r * d_model * ob                             # out tiles
                + tm_r * ff_pad * 4                                   # f32 hidden
                + tm_r * d_model * 4)                                 # f32 matmul-2 result

    resident = False
    if mode in ("auto", "resident"):
        tm_res = tm_
        while tm_res > sub and resident_vmem(tm_res) > cfg["resident_budget"]:
            tm_res = max(sub, _round_up(tm_res // 2, sub))
        fits = resident_vmem(tm_res) <= cfg["resident_budget"]
        if mode == "resident":
            if not fits:
                raise ValueError("FFN weights do not fit the resident-VMEM budget")
            resident = True
        else:
            # Only prefer residency when it does not force a tiny M tile.
            resident = fits and tm_res >= min(tm_, 256)
        if resident and tm_res != tm_:
            tm_ = tm_res
            m_pad = _round_up(m, tm_)
            n_m_tiles = m_pad // tm_

    # ---------------------------- padding -----------------------------------
    if m_pad != m:
        x2d = jnp.pad(x2d, ((0, m_pad - m), (0, 0)))
    if ff_pad != d_ff:
        # gelu(0) == 0, so zero-padded d_ff columns/rows contribute nothing.
        # TODO(synk): in production pre-pad the weights once, outside the hot path.
        w1_t = jnp.pad(w1_t, ((0, 0), (0, ff_pad - d_ff)))
        w2_t = jnp.pad(w2_t, ((0, ff_pad - d_ff), (0, 0)))

    # --------------------------- cost estimate ------------------------------
    weight_reads = 1 if resident else n_m_tiles
    cost = pl.CostEstimate(
        flops=4 * m_pad * d_model * ff_pad,
        transcendentals=m_pad * ff_pad,
        bytes_accessed=(m_pad * d_model * xb
                        + weight_reads * (d_model * ff_pad + ff_pad * d_model) * wb
                        + m_pad * d_model * ob),
    )

    # --------------------------- VMEM budget --------------------------------
    if resident:
        vmem_est = resident_vmem(tm_)
    else:
        vmem_est = (2 * tm_ * d_model * xb
                    + 2 * d_model * tn_ * wb
                    + 2 * tn_ * d_model * wb
                    + 2 * tm_ * d_model * ob
                    + tm_ * d_model * 4           # f32 accumulator scratch
                    + 2 * tm_ * tn_ * 4)          # f32 hidden temp headroom
    vmem_limit = int(min(max(int(1.5 * vmem_est), 32 * _MIB), cfg["vmem_limit_cap"]))

    # --------------------------- pallas_call --------------------------------
    if resident:
        out = pl.pallas_call(
            _ffn_resident_kernel,
            out_shape=jax.ShapeDtypeStruct((m_pad, d_model), x.dtype),
            grid_spec=pltpu.PrefetchScalarGridSpec(
                num_scalar_prefetch=0,
                grid=(n_m_tiles,),
                in_specs=[
                    pl.BlockSpec((tm_, d_model), lambda i: (i, 0)),
                    pl.BlockSpec((d_model, ff_pad), lambda i: (0, 0)),   # DMA'd once
                    pl.BlockSpec((ff_pad, d_model), lambda i: (0, 0)),   # DMA'd once
                ],
                out_specs=pl.BlockSpec((tm_, d_model), lambda i: (i, 0)),
            ),
            compiler_params=pltpu.CompilerParams(
                dimension_semantics=("parallel",),
                vmem_limit_bytes=vmem_limit,
            ),
            cost_estimate=cost,
        )(x2d, w1_t, w2_t)
    else:
        out = pl.pallas_call(
            _ffn_streamed_kernel,
            out_shape=jax.ShapeDtypeStruct((m_pad, d_model), x.dtype),
            grid_spec=pltpu.PrefetchScalarGridSpec(
                num_scalar_prefetch=0,
                grid=(n_m_tiles, n_k),
                in_specs=[
                    pl.BlockSpec((tm_, d_model), lambda i, k: (i, 0)),
                    pl.BlockSpec((d_model, tn_), lambda i, k: (0, k)),
                    pl.BlockSpec((tn_, d_model), lambda i, k: (k, 0)),
                ],
                out_specs=pl.BlockSpec((tm_, d_model), lambda i, k: (i, 0)),
                scratch_shapes=[pltpu.VMEM((tm_, d_model), jnp.float32)],
            ),
            compiler_params=pltpu.CompilerParams(
                dimension_semantics=("parallel", "arbitrary"),
                vmem_limit_bytes=vmem_limit,
            ),
            cost_estimate=cost,
        )(x2d, w1_t, w2_t)

    return out[:m].reshape(orig_shape)


def ffn_reference(x, w1, w2):
    """Reference with PyTorch-layout weights: w1 (d_ff, d_model), w2 (d_model, d_ff)."""
    h = x @ w1.T
    h = 0.5 * h * (1.0 + jax.lax.erf(h * _INV_SQRT2))
    return h @ w2.T


if __name__ == "__main__":
    key = jax.random.PRNGKey(0)
    kx, k1, k2, k3, k4, kx2 = jax.random.split(key, 6)

    # ---- Test 1: small f32 FFN, auto (weights-resident) path ---------------
    batch, seq, d_model, d_ff = 2, 8, 32, 128
    x = jax.random.normal(kx, (batch, seq, d_model), dtype=jnp.float32)
    # Synthetic weights in PyTorch nn.Linear layout (out_features, in_features).
    w1 = jax.random.normal(k1, (d_ff, d_model), dtype=jnp.float32) * 0.05
    w2 = jax.random.normal(k2, (d_model, d_ff), dtype=jnp.float32) * 0.05
    # Pre-transpose once (outside the hot path) to (in, out) layout.
    w1_t, w2_t = jnp.asarray(w1.T), jnp.asarray(w2.T)

    out = jax.block_until_ready(ffn_pallas(x, w1_t, w2_t))
    ref = ffn_reference(x, w1, w2)
    assert out.shape == (batch, seq, d_model)
    assert jnp.allclose(out, ref, atol=2e-5, rtol=2e-5), "resident path mismatch"

    # ---- Test 2: streamed path with 2 d_ff tiles and 2 M tiles -------------
    d_ff2 = 256
    w1b = jax.random.normal(k3, (d_ff2, d_model), dtype=jnp.float32) * 0.05
    w2b = jax.random.normal(k4, (d_model, d_ff2), dtype=jnp.float32) * 0.05
    out_s = jax.block_until_ready(
        ffn_pallas(x, jnp.asarray(w1b.T), jnp.asarray(w2b.T),
                   tm=8, tn_ff=128, mode="streamed"))
    ref_s = ffn_reference(x, w1b, w2b)
    assert jnp.allclose(out_s, ref_s, atol=2e-5, rtol=2e-5), "streamed path mismatch"

    # ---- Test 3: bf16 inputs, M not tile-aligned (padding + bf16 sublanes) --
    xb16 = jax.random.normal(kx2, (batch, 7, d_model), dtype=jnp.bfloat16)
    w1_16, w2_16 = w1.astype(jnp.bfloat16), w2.astype(jnp.bfloat16)
    out_b = jax.block_until_ready(
        ffn_pallas(xb16, jnp.asarray(w1_16.T), jnp.asarray(w2_16.T)))
    ref_b = ffn_reference(xb16.astype(jnp.float32),
                          w1_16.astype(jnp.float32), w2_16.astype(jnp.float32))
    assert out_b.shape == (batch, 7, d_model)
    assert jnp.allclose(out_b.astype(jnp.float32), ref_b, atol=5e-2, rtol=5e-2), \
        "bf16 path mismatch"

    print("KERNEL_OK")
</pallas_src>

<mosaic_0001>
module attributes {stable_mosaic.version = 11 : i64} {
  func.func @_ffn_resident_kernel(%arg0: i32, %arg1: memref<16x32xf32, #tpu.memory_space<vmem>>, %arg2: memref<32x128xf32, #tpu.memory_space<vmem>>, %arg3: memref<128x32xf32, #tpu.memory_space<vmem>>, %arg4: memref<16x32xf32, #tpu.memory_space<vmem>>) attributes {dimension_semantics = [#tpu.dimension_semantics<parallel>], iteration_bounds = array<i64: 1>, scalar_prefetch = 0 : i64, scratch_operands = 0 : i64, tpu.core_type = #tpu.core_type<tc>, window_params = [{transform_indices = @transform_0, window_bounds = array<i64: 16, 32>}, {pipeline_mode = #tpu.pipeline_mode<synchronous>, transform_indices = @transform_1, window_bounds = array<i64: 32, 128>}, {pipeline_mode = #tpu.pipeline_mode<synchronous>, transform_indices = @transform_2, window_bounds = array<i64: 128, 32>}, {transform_indices = @transform_3, window_bounds = array<i64: 16, 32>}]} {
    %c0 = arith.constant 0 : index
    %c0_0 = arith.constant 0 : index
    %0 = vector.load %arg1[%c0, %c0_0] : memref<16x32xf32, #tpu.memory_space<vmem>>, vector<16x32xf32>
    %c0_1 = arith.constant 0 : index
    %c0_2 = arith.constant 0 : index
    %1 = vector.load %arg2[%c0_1, %c0_2] : memref<32x128xf32, #tpu.memory_space<vmem>>, vector<32x128xf32>
    %cst = arith.constant dense<0.000000e+00> : vector<16x128xf32>
    %2 = tpu.matmul %0, %1, %cst {dimension_numbers = #tpu.dot_dimension_numbers<[1], [0], [0], [1], [0, 0, 1, 1], [], []>} : vector<16x32xf32>, vector<32x128xf32>, vector<16x128xf32> -> vector<16x128xf32>
    %cst_3 = arith.constant 5.000000e-01 : f32
    %3 = vector.broadcast %cst_3 : f32 to vector<16x128xf32>
    %4 = arith.mulf %3, %2 : vector<16x128xf32>
    %cst_4 = arith.constant 0.707106769 : f32
    %5 = vector.broadcast %cst_4 : f32 to vector<16x128xf32>
    %6 = arith.mulf %2, %5 : vector<16x128xf32>
    %7 = math.erf %6 : vector<16x128xf32>
    %cst_5 = arith.constant 1.000000e+00 : f32
    %8 = vector.broadcast %cst_5 : f32 to vector<16x128xf32>
    %9 = arith.addf %8, %7 : vector<16x128xf32>
    %10 = arith.mulf %4, %9 : vector<16x128xf32>
    %c0_6 = arith.constant 0 : index
    %c0_7 = arith.constant 0 : index
    %11 = vector.load %arg3[%c0_6, %c0_7] : memref<128x32xf32, #tpu.memory_space<vmem>>, vector<128x32xf32>
    %cst_8 = arith.constant dense<0.000000e+00> : vector<16x32xf32>
    %12 = tpu.matmul %10, %11, %cst_8 {dimension_numbers = #tpu.dot_dimension_numbers<[1], [0], [0], [1], [0, 0, 1, 1], [], []>} : vector<16x128xf32>, vector<128x32xf32>, vector<16x32xf32> -> vector<16x32xf32>
    %c0_9 = arith.constant 0 : index
    %c0_10 = arith.constant 0 : index
    %13 = vector.load %arg4[%c0_9, %c0_10] : memref<16x32xf32, #tpu.memory_space<vmem>>, vector<16x32xf32>
    tpu.vector_store %arg4[%c0_9, %c0_10], %12 {strides = array<i32>} : memref<16x32xf32, #tpu.memory_space<vmem>>, vector<16x32xf32>,
    return
  }
  func.func @transform_0(%arg0: i32) -> (i32, i32) {
    %c0_i32 = arith.constant 0 : i32
    %c0_i32_0 = arith.constant 0 : i32
    return %arg0, %c0_i32 : i32, i32
  }
  func.func @transform_1(%arg0: i32) -> (i32, i32) {
    %c0_i32 = arith.constant 0 : i32
    %c0_i32_0 = arith.constant 0 : i32
    %c0_i32_1 = arith.constant 0 : i32
    return %c0_i32, %c0_i32_0 : i32, i32
  }
  func.func @transform_2(%arg0: i32) -> (i32, i32) {
    %c0_i32 = arith.constant 0 : i32
    %c0_i32_0 = arith.constant 0 : i32
    %c0_i32_1 = arith.constant 0 : i32
    return %c0_i32, %c0_i32_0 : i32, i32
  }
  func.func @transform_3(%arg0: i32) -> (i32, i32) {
    %c0_i32 = arith.constant 0 : i32
    %c0_i32_0 = arith.constant 0 : i32
    return %arg0, %c0_i32 : i32, i32
  }
}

</mosaic_0001>

<llo_original>
// kernel: tpu_custom_call.1
$region0: #{tpu_custom_call.1}
  #allocation0 [shape = 'u32[]', space=smem, size = 0x4, offset = 0x4, fixed_abs, tag = 'smem constant byte address 0x4 - core index']
  #allocation1 [shape = 'u32[72,128]{1,0:T(1,128)}', space=vmem, size = 0x9000, scoped, tag = 'internal scratch']
  %s0 = inlined_call_operand.vmem [shape: f32[16,32], index: 0, kind: input, shape index: {}]
  %s1 = inlined_call_operand.vmem [shape: f32[32,128], index: 1, kind: input, shape index: {}]
  %s2 = inlined_call_operand.vmem [shape: f32[128,32], index: 2, kind: input, shape index: {}]
  %s3 = inlined_call_operand.hbm [shape: f32[16,32], index: 3, kind: output, shape index: {}]
  %s4 = sld [smem:[#allocation0]]
  $region22: #{tpu_custom_call.1} parent=0
    _
  %s6 = ssub.s32 1, %s4
  %s7 = scalar_select 0, %s6, %s4
  $region1: #{tpu_custom_call.1} parent=0
    #allocation2 [shape = 'u8[8192]{0}', space=vmem, size = 0x2000, scoped, tag = 'output window, operand 0, single buffered']
    #allocation3 [shape = 's32[1]{0}', space=sflag, size = 0x4, scoped, tag = 'scoped memory for tpu_custom_call.1']
    %8 = vsyncpa [#allocation3], 0
    // Predicated region
    $region2: #{tpu_custom_call.1} parent=1 // pred_check
      _
    $region3: #{tpu_custom_call.1} parent=1 // pred_check_branch
      %10 = sbr.rel (0) target = $region5
    $region4: #{tpu_custom_call.1} parent=1 // pred_region
      _
    $region5: #{tpu_custom_call.1} parent=1 // pred_fallthru
      _
    // Predicated region
    $region6: #{tpu_custom_call.1} parent=1 // pred_check
      _
    $region7: #{tpu_custom_call.1} parent=1 // pred_check_branch
      %12 = sbr.rel (0) target = $region9
    $region8: #{tpu_custom_call.1} parent=1 // pred_region
      _
    $region9: #{tpu_custom_call.1} parent=1 // pred_fallthru
      _
    // Predicated region
    $region10: #{tpu_custom_call.1} parent=1 // pred_check
      _
    $region11: #{tpu_custom_call.1} parent=1 // pred_check_branch
      %14 = sbr.rel (0) target = $region13
    $region12: #{tpu_custom_call.1} parent=1 // pred_region
      _
    $region13: #{tpu_custom_call.1} parent=1 // pred_fallthru
      _
    %v15 = vld [vmem:[%s0] sm:$0xff]
    %v16 = vld [vmem:[%s0 + $0x8] sm:$0xff]
    %v17 = vld [vmem:[%s1] sm:$0xff]
    %v18 = vld [vmem:[%s1 + $0x8] sm:$0xff]
    %v19 = vld [vmem:[%s1 + $0x10] sm:$0xff]
    %v20 = vld [vmem:[%s1 + $0x18] sm:$0xff]
    %vm21 = vcmask 261120
    %v23 = vsel %vm21, %v15, 0
    %v26 = vsel %vm21, %v16, 0
    %28 = vmatpush.msra.mxu0 0.0
    %29 = vmatpush.msra.mxu0 0.0
    %30 = vmatpush.msra.mxu0 0.0
    %31 = vmatpush.msra.mxu0 0.0
    %32 = vmatpush.msra.mxu0 0.0
    %33 = vmatpush.msra.mxu0 0.0
    %34 = vmatpush.msra.mxu0 0.0
    %35 = vmatpush.msra.mxu0 0.0
    %36 = vmatpush.msra.mxu0 0.0
    %37 = vmatpush.msra.mxu0 0.0
    %38 = vmatpush.msra.mxu0 0.0
    %39 = vmatpush.msra.mxu0 0.0
    %40 = vmatpush.msra.mxu0 %v20
    %41 = vmatpush.msra.mxu0 %v19
    %42 = vmatpush.msra.mxu0 %v18
    %43 = vmatpush.msra.mxu0 %v17
    %44 = vmatmul.f32.gmra.mxu0 %v23
    %v45 = vpop.f32.mrf.mxu0
    %v46 = vadd.f32 0.0, %v45
    %47 = vmatmul.f32.gmra.mxu0 %v26
    %v48 = vpop.f32.mrf.mxu0
    %v49 = vadd.f32 0.0, %v48
    %50 = vdwg.mxu0
    %v51 = vmul.f32 %v46, 0.5
    %v52 = vmul.f32 %v49, 0.5
    %v53 = vmul.f32 %v46, 0.70710677
    %v54 = vmul.f32 %v49, 0.70710677
    %v55 = vmul.f32 %v53, %v53
    %v56 = vmin.f32 16.0, %v55
    %v57 = vmul.f32 %v56, 2.1237322e-06
    %v58 = vadd.f32 %v57, 0.00028619796
    %v59 = vmul.f32 %v56, %v58
    %v60 = vadd.f32 %v59, 0.0036580483
    %v61 = vmul.f32 %v56, %v60
    %v62 = vadd.f32 %v61, 0.05243302
    %v63 = vmul.f32 %v56, %v62
    %v64 = vadd.f32 %v63, 0.18741608
    %v65 = vmul.f32 %v56, %v64
    %v66 = vadd.f32 %v65, 1.1283791
    %v67 = vmul.f32 %v53, %v66
    %v68 = vmul.f32 %v56, 3.8918573e-05
    %v69 = vadd.f32 %v68, 0.001143296
    %v70 = vmul.f32 %v56, %v69
    %v71 = vadd.f32 %v70, 0.014752088
    %v72 = vmul.f32 %v56, %v71
    %v73 = vadd.f32 %v72, 0.112945676
    %v74 = vmul.f32 %v56, %v73
    %v75 = vadd.f32 %v74, 0.4994258
    %v76 = vmul.f32 %v56, %v75
    %v77 = vadd.f32 %v76, 1.0
    %v78 = vrcp.pop %v77
    %v79 = vmul.f32 %v77, %v78
    %v80 = vsub.f32 1.0, %v79
    %v81 = vmul.f32 %v78, %v80
    %v82 = vadd.f32 %v78, %v81
    %vm83 = vweird.f32 %v77
    %vm84 = vweird.f32 %v78
    %vm85 = vmor %vm83, %vm84
    %v86 = vsel %vm85, %v78, %v82
    %v87 = vand.u32 2147483647, %v77
    %vm88 = vcmp.eq.f32.partialorder %v87, 8.507059e+37
    %v89 = vand.u32 %v77, 2147483648
    %v90 = vor.u32 1.1754944e-38, %v89
    %v91 = vsel %vm88, %v90, %v86
    %v92 = vmul.f32 %v67, %v91
    %v93 = vmin.f32 %v92, 1.0
    %v94 = vmax.f32 %v93, -1.0
    %v95 = vmul.f32 %v54, %v54
    %v96 = vmin.f32 16.0, %v95
    %v97 = vmul.f32 %v96, 2.1237322e-06
    %v98 = vadd.f32 %v97, 0.00028619796
    %v99 = vmul.f32 %v96, %v98
    %v100 = vadd.f32 %v99, 0.0036580483
    %v101 = vmul.f32 %v96, %v100
    %v102 = vadd.f32 %v101, 0.05243302
    %v103 = vmul.f32 %v96, %v102
    %v104 = vadd.f32 %v103, 0.18741608
    %v105 = vmul.f32 %v96, %v104
    %v106 = vadd.f32 %v105, 1.1283791
    %v107 = vmul.f32 %v54, %v106
    %v108 = vmul.f32 %v96, 3.8918573e-05
    %v109 = vadd.f32 %v108, 0.001143296
    %v110 = vmul.f32 %v96, %v109
    %v111 = vadd.f32 %v110, 0.014752088
    %v112 = vmul.f32 %v96, %v111
    %v113 = vadd.f32 %v112, 0.112945676
    %v114 = vmul.f32 %v96, %v113
    %v115 = vadd.f32 %v114, 0.4994258
    %v116 = vmul.f32 %v96, %v115
    %v117 = vadd.f32 %v116, 1.0
    %v118 = vrcp.pop %v117
    %v119 = vmul.f32 %v117, %v118
    %v120 = vsub.f32 1.0, %v119
    %v121 = vmul.f32 %v118, %v120
    %v122 = vadd.f32 %v118, %v121
    %vm123 = vweird.f32 %v117
    %vm124 = vweird.f32 %v118
    %vm125 = vmor %vm123, %vm124
    %v126 = vsel %vm125, %v118, %v122
    %v127 = vand.u32 2147483647, %v117
    %vm128 = vcmp.eq.f32.partialorder %v127, 8.507059e+37
    %v129 = vand.u32 %v117, 2147483648
    %v130 = vor.u32 1.1754944e-38, %v129
    %v131 = vsel %vm128, %v130, %v126
    %v132 = vmul.f32 %v107, %v131
    %v133 = vmin.f32 %v132, 1.0
    %v134 = vmax.f32 %v133, -1.0
    %v135 = vadd.f32 %v94, 1.0
    %v136 = vadd.f32 %v134, 1.0
    %v137 = vmul.f32 %v51, %v135
    %v138 = vmul.f32 %v52, %v136
    %v139 = vld [vmem:[%s2] sm:$0xff]
    %v140 = vld [vmem:[%s2 + $0x8] sm:$0xff]
    %v141 = vld [vmem:[%s2 + $0x10] sm:$0xff]
    %v142 = vld [vmem:[%s2 + $0x18] sm:$0xff]
    %v143 = vld [vmem:[%s2 + $0x20] sm:$0xff]
    %v144 = vld [vmem:[%s2 + $0x28] sm:$0xff]
    %v145 = vld [vmem:[%s2 + $0x30] sm:$0xff]
    %v146 = vld [vmem:[%s2 + $0x38] sm:$0xff]
    %v147 = vld [vmem:[%s2 + $0x40] sm:$0xff]
    %v148 = vld [vmem:[%s2 + $0x48] sm:$0xff]
    %v149 = vld [vmem:[%s2 + $0x50] sm:$0xff]
    %v150 = vld [vmem:[%s2 + $0x58] sm:$0xff]
    %v151 = vld [vmem:[%s2 + $0x60] sm:$0xff]
    %v152 = vld [vmem:[%s2 + $0x68] sm:$0xff]
    %v153 = vld [vmem:[%s2 + $0x70] sm:$0xff]
    %v154 = vld [vmem:[%s2 + $0x78] sm:$0xff]
    %155 = vmatpush.msra.mxu0 %v154
    %156 = vmatpush.msra.mxu0 %v153
    %157 = vmatpush.msra.mxu0 %v152
    %158 = vmatpush.msra.mxu0 %v151
    %159 = vmatpush.msra.mxu0 %v150
    %160 = vmatpush.msra.mxu0 %v149
    %161 = vmatpush.msra.mxu0 %v148
    %162 = vmatpush.msra.mxu0 %v147
    %163 = vmatpush.msra.mxu0 %v146
    %164 = vmatpush.msra.mxu0 %v145
    %165 = vmatpush.msra.mxu0 %v144
    %166 = vmatpush.msra.mxu0 %v143
    %167 = vmatpush.msra.mxu0 %v142
    %168 = vmatpush.msra.mxu0 %v141
    %169 = vmatpush.msra.mxu0 %v140
    %170 = vmatpush.msra.mxu0 %v139
    %171 = vmatmul.f32.gmra.mxu0 %v137
    %v172 = vpop.f32.mrf.mxu0
    %v173 = vadd.f32 0.0, %v172
    %174 = vmatmul.f32.gmra.mxu0 %v138
    %v175 = vpop.f32.mrf.mxu0
    %v176 = vadd.f32 0.0, %v175
    %177 = vdwg.mxu0
    %178 = vst.msk [vmem:[#allocation2] sm:$0xff] %vm21, %v173
    %179 = vst.msk [vmem:[#allocation2 + $0x8] sm:$0xff] %vm21, %v176
    // Predicated region
    $region14: #{tpu_custom_call.1} parent=1 // pred_check
      _
    $region15: #{tpu_custom_call.1} parent=1 // pred_check_branch
      %181 = sbr.rel (0) target = $region17
    $region16: #{tpu_custom_call.1} parent=1 // pred_region
      %183 = vsyncadd [#allocation3], 0
      %s184 = sshll.u32 [#allocation2], 4
      %s185 = int_to_ptr.vmem [resolvable:$true] %s184
      %s186 = sshll.u32 %s3, 4
      %s187 = int_to_ptr.hbm [resolvable:$true] %s186
      %192 = dma.vmem_to_hbm [thread:$0]  %s185, 256, %s187, [#allocation3], 128, 128, 8
    $region17: #{tpu_custom_call.1} parent=1 // pred_fallthru
      _
    // Predicated region
    $region18: #{tpu_custom_call.1} parent=1 // pred_check
      _
    $region19: #{tpu_custom_call.1} parent=1 // pred_check_branch
      %194 = sbr.rel (0) target = $region21
    $region20: #{tpu_custom_call.1} parent=1 // pred_region
      %196 = dma.done [#allocation3], 256
    $region21: #{tpu_custom_call.1} parent=1 // pred_fallthru
      _
    %197 = vsyncpa [#allocation3], 1

</llo_original>
